<compile_context>
chip_gen: v7x
topology: tpu7x:2x2x1
jax: 0.10.0
libtpu: 0.0.40
codegen_flags: <defaults>
</compile_context>

<pallas_src>
import functools

import jax
import jax.numpy as jnp
from jax.experimental import pallas as pl
from jax.experimental.pallas import tpu as pltpu


def _round_up(x: int, m: int) -> int:
    return ((x + m - 1) // m) * m


def _num_tensorcores() -> int:
    """Best-effort TensorCore count of the local chip (2 on v7x, else 1)."""
    try:
        kind = jax.devices()[0].device_kind.lower()
    except Exception:  # device introspection only; safe fallback
        return 1
    return 2 if "v7" in kind else 1


def prepare_params(w, b):
    """One-time parameter prep (hoist out of the per-step path).

    Args:
      w: (action_dim, latent_dim) float -- PyTorch nn.Linear weight layout.
      b: (action_dim,) float.
    Returns:
      wt: (latent_dim, action_dim) float32, b2: (1, action_dim) float32.
    """
    wt = jnp.asarray(w, jnp.float32).T
    b2 = jnp.asarray(b, jnp.float32).reshape(1, -1)
    return wt, b2


def _cholnet_diag_kernel(x_ref, wt_ref, b_ref, o_ref, *, epsilon: float):
    # Linear layer: (bm, L) @ (L, A) + (1, A) -- single MXU matmul, f32 accumulate.
    z = jnp.dot(x_ref[...], wt_ref[...], preferred_element_type=jnp.float32)
    z = z + b_ref[...]  # broadcast (1, A) over (bm, A)

    # Softplus(beta=1, threshold=20): exact PyTorch semantics.
    zc = jnp.minimum(z, 20.0)                       # keep exp() off the dead branch
    sp = jnp.where(z > 20.0, z, jnp.log1p(jnp.exp(zc)))

    # Narrow store: (bm, action_dim) block, last dim == full output dim.
    o_ref[...] = (sp + epsilon).astype(o_ref.dtype)


def cholnet_diag_forward(x, wt, b2, epsilon: float, *, bm: int = 8192,
                         vmem_budget_bytes: int = 32 * 1024 * 1024):
    """Pallas forward for CholNet(DIAG, DIAG, SOFTPLUS).

    Args:
      x:  (batch, latent_dim) float32.
      wt: (latent_dim, action_dim) float32 (from prepare_params).
      b2: (1, action_dim) float32 (from prepare_params).
      epsilon: float.
      bm: requested batch tile (rows per grid step); clamped to a multiple of 8,
          to the (8-padded) batch size, and to the VMEM budget.
      vmem_budget_bytes: scoped-VMEM budget passed to the compiler
          (32 MiB is safe on v5e/v6e/v7x; v7x physical VMEM is only 64 MiB).
    Returns:
      (batch, action_dim) float32 diagonal-Cholesky factors.
    """
    batch, latent_dim = x.shape
    action_dim = wt.shape[1]

    # ---- pad batch rows only to a multiple of 8 (only when needed) ----------
    padded_batch = _round_up(batch, 8)
    xp = x if padded_batch == batch else jnp.pad(x, ((0, padded_batch - batch), (0, 0)))

    # ---- pick the batch tile -------------------------------------------------
    bm = max(8, _round_up(min(bm, padded_batch), 8))
    # VMEM cap: double-buffered x + out tiles (residents are tiny, leave headroom).
    resident_bytes = 4 * (latent_dim * action_dim + action_dim)
    per_row_bytes = 2 * (latent_dim + action_dim) * 4
    avail = max(vmem_budget_bytes - 2 * resident_bytes - (1 << 20), 8 * per_row_bytes)
    bm_cap = max(8, (avail // per_row_bytes) // 8 * 8)
    bm = min(bm, bm_cap)

    # v7x (2 TensorCores): prefer an even grid with >= 2 pipelined steps per core.
    # v5e/v6e (1 TensorCore): never force a split -- it is pure per-step overhead.
    num_tc = _num_tensorcores()
    if num_tc > 1:
        target = max(4, 2 * num_tc)
        if padded_batch >= target * 8 and pl.cdiv(padded_batch, bm) < target:
            bm = max(8, _round_up(pl.cdiv(padded_batch, target), 8))
        gm = pl.cdiv(padded_batch, bm)
        if gm > 1 and gm % 2 == 1:
            bm_even = max(8, _round_up(pl.cdiv(padded_batch, gm + 1), 8))
            if pl.cdiv(padded_batch, bm_even) % 2 == 0:
                bm = bm_even
    grid_m = pl.cdiv(padded_batch, bm)

    kernel = functools.partial(_cholnet_diag_kernel, epsilon=float(epsilon))

    cost = pl.CostEstimate(
        flops=2 * padded_batch * latent_dim * action_dim,
        transcendentals=2 * padded_batch * action_dim,        # exp + log1p per element
        bytes_accessed=4 * (padded_batch * latent_dim + latent_dim * action_dim
                            + action_dim + padded_batch * action_dim),
    )

    out = pl.pallas_call(
        kernel,
        out_shape=jax.ShapeDtypeStruct((padded_batch, action_dim), jnp.float32),
        grid_spec=pltpu.PrefetchScalarGridSpec(
            num_scalar_prefetch=0,
            grid=(grid_m,),
            in_specs=[
                pl.BlockSpec((bm, latent_dim), lambda i: (i, 0)),         # x tile
                pl.BlockSpec((latent_dim, action_dim), lambda i: (0, 0)),  # W^T (resident)
                pl.BlockSpec((1, action_dim), lambda i: (0, 0)),           # bias (resident)
            ],
            out_specs=pl.BlockSpec((bm, action_dim), lambda i: (i, 0)),
        ),
        compiler_params=pltpu.CompilerParams(
            dimension_semantics=("parallel",),
            vmem_limit_bytes=int(vmem_budget_bytes),
        ),
        cost_estimate=cost,
    )(xp, wt, b2)

    return out if padded_batch == batch else out[:batch]


def _reference(x, w, b, epsilon):
    z = x @ w.T + b
    sp = jnp.where(z > 20.0, z, jnp.log1p(jnp.exp(jnp.minimum(z, 20.0))))
    return sp + epsilon


if __name__ == "__main__":
    # Small shapes consistent with the module: latent_dim=32, action_dim=4.
    latent_dim = 32
    action_dim = 4
    epsilon = 1e-6

    key = jax.random.PRNGKey(0)
    kx, kw, kb = jax.random.split(key, 3)
    bound = 1.0 / (latent_dim ** 0.5)
    w = jax.random.uniform(kw, (action_dim, latent_dim), jnp.float32, -bound, bound)
    b = jax.random.uniform(kb, (action_dim,), jnp.float32, -bound, bound)
    wt, b2 = prepare_params(w, b)   # hoisted one-time prep

    # Case 1: tiny batch (bm clamps down to 8, single grid step).
    batch = 8
    x = jax.random.normal(kx, (batch, latent_dim), dtype=jnp.float32)
    out = jax.block_until_ready(cholnet_diag_forward(x, wt, b2, epsilon))
    ref = _reference(x, w, b, epsilon)
    assert out.shape == (batch, action_dim)
    assert jnp.allclose(out, ref, atol=1e-5, rtol=1e-5), "mismatch vs reference (batch=8)"

    # Case 2: multi-step grid with a partial trailing block (200 % 64 != 0).
    batch2 = 200
    x2 = jax.random.normal(jax.random.PRNGKey(1), (batch2, latent_dim), dtype=jnp.float32)
    out2 = jax.block_until_ready(cholnet_diag_forward(x2, wt, b2, epsilon, bm=64))
    ref2 = _reference(x2, w, b, epsilon)
    assert out2.shape == (batch2, action_dim)
    assert jnp.allclose(out2, ref2, atol=1e-5, rtol=1e-5), "mismatch vs reference (batch=200)"

    # Case 3: batch not a multiple of 8 (exercises the 8-row padding path).
    batch3 = 13
    x3 = jax.random.normal(jax.random.PRNGKey(2), (batch3, latent_dim), dtype=jnp.float32)
    out3 = jax.block_until_ready(cholnet_diag_forward(x3, wt, b2, epsilon))
    ref3 = _reference(x3, w, b, epsilon)
    assert out3.shape == (batch3, action_dim)
    assert jnp.allclose(out3, ref3, atol=1e-5, rtol=1e-5), "mismatch vs reference (batch=13)"

    # TODO(synk): other CholNet branches (FULL cov with fill_triangular /
    # spherical-Cholesky / Givens-eigen + torch.linalg.cholesky) are sequential,
    # tiny-matrix host-style code with no clean Pallas hot path and are not
    # implemented here.

    print("KERNEL_OK")
</pallas_src>

<mosaic_0001>
module attributes {stable_mosaic.version = 11 : i64} {
  func.func @_cholnet_diag_kernel(%arg0: i32, %arg1: memref<8x32xf32, #tpu.memory_space<vmem>>, %arg2: memref<32x4xf32, #tpu.memory_space<vmem>>, %arg3: memref<1x4xf32, #tpu.memory_space<vmem>>, %arg4: memref<8x4xf32, #tpu.memory_space<vmem>>) attributes {dimension_semantics = [#tpu.dimension_semantics<parallel>], iteration_bounds = array<i64: 1>, scalar_prefetch = 0 : i64, scratch_operands = 0 : i64, tpu.core_type = #tpu.core_type<tc>, window_params = [{transform_indices = @transform_0, window_bounds = array<i64: 8, 32>}, {pipeline_mode = #tpu.pipeline_mode<synchronous>, transform_indices = @transform_1, window_bounds = array<i64: 32, 4>}, {pipeline_mode = #tpu.pipeline_mode<synchronous>, transform_indices = @transform_2, window_bounds = array<i64: 1, 4>}, {transform_indices = @transform_3, window_bounds = array<i64: 8, 4>}]} {
    %c0 = arith.constant 0 : index
    %c0_0 = arith.constant 0 : index
    %0 = vector.load %arg1[%c0, %c0_0] : memref<8x32xf32, #tpu.memory_space<vmem>>, vector<8x32xf32>
    %c0_1 = arith.constant 0 : index
    %c0_2 = arith.constant 0 : index
    %1 = vector.load %arg2[%c0_1, %c0_2] : memref<32x4xf32, #tpu.memory_space<vmem>>, vector<32x4xf32>
    %cst = arith.constant dense<0.000000e+00> : vector<8x4xf32>
    %2 = tpu.matmul %0, %1, %cst {dimension_numbers = #tpu.dot_dimension_numbers<[1], [0], [0], [1], [0, 0, 1, 1], [], []>} : vector<8x32xf32>, vector<32x4xf32>, vector<8x4xf32> -> vector<8x4xf32>
    %c0_3 = arith.constant 0 : index
    %c0_4 = arith.constant 0 : index
    %3 = vector.load %arg3[%c0_3, %c0_4] : memref<1x4xf32, #tpu.memory_space<vmem>>, vector<1x4xf32>
    %4 = vector.broadcast %3 : vector<1x4xf32> to vector<8x4xf32>
    %5 = arith.addf %2, %4 : vector<8x4xf32>
    %cst_5 = arith.constant 2.000000e+01 : f32
    %6 = vector.broadcast %cst_5 : f32 to vector<8x4xf32>
    %7 = arith.minimumf %5, %6 : vector<8x4xf32>
    %cst_6 = arith.constant 2.000000e+01 : f32
    %8 = vector.broadcast %cst_6 : f32 to vector<8x4xf32>
    %9 = arith.cmpf ogt, %5, %8 : vector<8x4xf32>
    %10 = math.exp %7 : vector<8x4xf32>
    %11 = math.log1p %10 : vector<8x4xf32>
    %12 = arith.select %9, %5, %11 : vector<8x4xi1>, vector<8x4xf32>
    %cst_7 = arith.constant 9.99999997E-7 : f32
    %13 = vector.broadcast %cst_7 : f32 to vector<8x4xf32>
    %14 = arith.addf %12, %13 : vector<8x4xf32>
    %c0_8 = arith.constant 0 : index
    %c0_9 = arith.constant 0 : index
    %15 = vector.load %arg4[%c0_8, %c0_9] : memref<8x4xf32, #tpu.memory_space<vmem>>, vector<8x4xf32>
    tpu.vector_store %arg4[%c0_8, %c0_9], %14 {strides = array<i32>} : memref<8x4xf32, #tpu.memory_space<vmem>>, vector<8x4xf32>,
    return
  }
  func.func @transform_0(%arg0: i32) -> (i32, i32) {
    %c0_i32 = arith.constant 0 : i32
    %c0_i32_0 = arith.constant 0 : i32
    return %arg0, %c0_i32 : i32, i32
  }
  func.func @transform_1(%arg0: i32) -> (i32, i32) {
    %c0_i32 = arith.constant 0 : i32
    %c0_i32_0 = arith.constant 0 : i32
    %c0_i32_1 = arith.constant 0 : i32
    return %c0_i32, %c0_i32_0 : i32, i32
  }
  func.func @transform_2(%arg0: i32) -> (i32, i32) {
    %c0_i32 = arith.constant 0 : i32
    %c0_i32_0 = arith.constant 0 : i32
    %c0_i32_1 = arith.constant 0 : i32
    return %c0_i32, %c0_i32_0 : i32, i32
  }
  func.func @transform_3(%arg0: i32) -> (i32, i32) {
    %c0_i32 = arith.constant 0 : i32
    %c0_i32_0 = arith.constant 0 : i32
    return %arg0, %c0_i32 : i32, i32
  }
}

</mosaic_0001>

<llo_original>
// kernel: tpu_custom_call.1
$region0: #{tpu_custom_call.1}
  #allocation0 [shape = 'u32[]', space=smem, size = 0x4, offset = 0x4, fixed_abs, tag = 'smem constant byte address 0x4 - core index']
  #allocation1 [shape = 'u32[144,128]{1,0:T(1,128)}', space=vmem, size = 0x12000, scoped, tag = 'internal scratch']
  %s0 = inlined_call_operand.vmem [shape: f32[8,32], index: 0, kind: input, shape index: {}]
  %s1 = inlined_call_operand.vmem [shape: f32[32,4], index: 1, kind: input, shape index: {}]
  %s2 = inlined_call_operand.vmem [shape: f32[1,4], index: 2, kind: input, shape index: {}]
  %s3 = inlined_call_operand.vmem [shape: f32[8,4], index: 3, kind: output, shape index: {}]
  %s4 = sld [smem:[#allocation0]]
  $region22: #{tpu_custom_call.1} parent=0
    _
  %s6 = ssub.s32 1, %s4
  %s7 = scalar_select 0, %s6, %s4
  // Predicated region
  $region2: #{tpu_custom_call.1} parent=0 // pred_check
    _
  $region3: #{tpu_custom_call.1} parent=0 // pred_check_branch
    %9 = sbr.rel (0) target = $region5
  $region4: #{tpu_custom_call.1} parent=0 // pred_region
    _
  $region5: #{tpu_custom_call.1} parent=0 // pred_fallthru
    _
  // Predicated region
  $region6: #{tpu_custom_call.1} parent=0 // pred_check
    _
  $region7: #{tpu_custom_call.1} parent=0 // pred_check_branch
    %11 = sbr.rel (0) target = $region9
  $region8: #{tpu_custom_call.1} parent=0 // pred_region
    _
  $region9: #{tpu_custom_call.1} parent=0 // pred_fallthru
    _
  // Predicated region
  $region10: #{tpu_custom_call.1} parent=0 // pred_check
    _
  $region11: #{tpu_custom_call.1} parent=0 // pred_check_branch
    %13 = sbr.rel (0) target = $region13
  $region12: #{tpu_custom_call.1} parent=0 // pred_region
    _
  $region13: #{tpu_custom_call.1} parent=0 // pred_fallthru
    _
  %v14 = vld [vmem:[%s0] sm:$0xff]
  %v15 = vld [vmem:[%s1] sm:$0xff]
  %v16 = vld [vmem:[%s1 + $0x8] sm:$0xff]
  %v17 = vld [vmem:[%s1 + $0x10] sm:$0xff]
  %v18 = vld [vmem:[%s1 + $0x18] sm:$0xff]
  %v19 = vld [vmem:[%s2] sm:$0x1]
  %v21 = vlaneseq
  %v22 = vshrl.u32 %v21, 7
  %v23 = vsub.s32 0, %v22
  %v24 = vrot.slane %v19, %v23
  %vm26 = vcmask 261120
  %v28 = vsel %vm26, %v14, 0
  %30 = vmatprep.subr.mxu0 0.0
  %31 = vmatpush1.msra.mxu0 %v15
  %32 = vmatprep.subr.mxu0 0.0
  %33 = vmatpush1.msra.mxu0 %v16
  %34 = vmatprep.subr.mxu0 0.0
  %35 = vmatpush1.msra.mxu0 %v17
  %36 = vmatprep.subr.mxu0 0.0
  %37 = vmatpush1.msra.mxu0 %v18
  %38 = vmatprep.subr.mxu0 0.0
  %39 = vmatpush1.msra.mxu0 0.0
  %40 = vmatprep.subr.mxu0 0.0
  %41 = vmatpush1.msra.mxu0 0.0
  %42 = vmatprep.subr.mxu0 0.0
  %43 = vmatpush1.msra.mxu0 0.0
  %44 = vmatprep.subr.mxu0 0.0
  %45 = vmatpush1.msra.mxu0 0.0
  %46 = vmatprep.subr.mxu0 0.0
  %47 = vmatpush1.msra.mxu0 0.0
  %48 = vmatprep.subr.mxu0 0.0
  %49 = vmatpush1.msra.mxu0 0.0
  %50 = vmatprep.subr.mxu0 0.0
  %51 = vmatpush1.msra.mxu0 0.0
  %52 = vmatprep.subr.mxu0 0.0
  %53 = vmatpush1.msra.mxu0 0.0
  %54 = vmatprep.subr.mxu0 0.0
  %55 = vmatpush1.msra.mxu0 0.0
  %56 = vmatprep.subr.mxu0 0.0
  %57 = vmatpush1.msra.mxu0 0.0
  %58 = vmatprep.subr.mxu0 0.0
  %59 = vmatpush1.msra.mxu0 0.0
  %60 = vmatprep.subr.mxu0 0.0
  %61 = vmatpush1.msra.mxu0 0.0
  %62 = vmatprep.subr.mxu0 0.0
  %63 = vmatpush1.msra.mxu0 0.0
  %64 = vmatprep.subr.mxu0 0.0
  %65 = vmatpush1.msra.mxu0 0.0
  %66 = vmatprep.subr.mxu0 0.0
  %67 = vmatpush1.msra.mxu0 0.0
  %68 = vmatprep.subr.mxu0 0.0
  %69 = vmatpush1.msra.mxu0 0.0
  %70 = vmatprep.subr.mxu0 0.0
  %71 = vmatpush1.msra.mxu0 0.0
  %72 = vmatprep.subr.mxu0 0.0
  %73 = vmatpush1.msra.mxu0 0.0
  %74 = vmatprep.subr.mxu0 0.0
  %75 = vmatpush1.msra.mxu0 0.0
  %76 = vmatprep.subr.mxu0 0.0
  %77 = vmatpush1.msra.mxu0 0.0
  %78 = vmatprep.subr.mxu0 0.0
  %79 = vmatpush1.msra.mxu0 0.0
  %80 = vmatprep.subr.mxu0 0.0
  %81 = vmatpush1.msra.mxu0 0.0
  %82 = vmatprep.subr.mxu0 0.0
  %83 = vmatpush1.msra.mxu0 0.0
  %84 = vmatprep.subr.mxu0 0.0
  %85 = vmatpush1.msra.mxu0 0.0
  %86 = vmatprep.subr.mxu0 0.0
  %87 = vmatpush1.msra.mxu0 0.0
  %88 = vmatprep.subr.mxu0 0.0
  %89 = vmatpush1.msra.mxu0 0.0
  %90 = vmatprep.subr.mxu0 0.0
  %91 = vmatpush1.msra.mxu0 0.0
  %92 = vmatprep.subr.mxu0 0.0
  %93 = vmatpush1.msra.mxu0 0.0
  %94 = vmatprep.mubr.f32.mxu0 0.0
  %95 = vmatmul.mubr.f32.gmra.mrb[0].mxu0 %v28
  %v96 = vpop.f32.mrb[0].mxu0
  %v97 = vadd.f32 %v24, %v96
  %v98 = vpop.f32.mrb[0].mxu0
  %99 = vdwg.mxu0
  %v100 = vmin.f32 %v97, 20.0
  %vm101 = vcmp.gt.f32.partialorder %v97, 20.0
  %v102 = vmul.f32 %v100, 1.442695
  %v103 = vpow.pop %v102
  %v104 = vadd.f32 %v103, 1.0
  %v105 = vlog2.pop %v104
  %v106 = vmul.f32 %v105, 0.6931472
  %v107 = vmul.f32 -0.5, %v103
  %v108 = vadd.f32 %v107, 1.0
  %v109 = vmul.f32 %v108, %v103
  %v110 = vand.u32 2147483647, %v103
  %vm111 = vcmp.lt.f32.partialorder %v110, 0.0004427343
  %v112 = vsel %vm111, %v109, %v106
  %v113 = vsel %vm101, %v97, %v112
  %v114 = vadd.f32 %v113, 1e-06
  %vm115 = vcmask 31744
  %116 = vst.msk [vmem:[%s3] sm:$0xff] %vm115, %v114
  // Predicated region
  $region14: #{tpu_custom_call.1} parent=0 // pred_check
    _
  $region15: #{tpu_custom_call.1} parent=0 // pred_check_branch
    %118 = sbr.rel (0) target = $region17
  $region16: #{tpu_custom_call.1} parent=0 // pred_region
    _
  $region17: #{tpu_custom_call.1} parent=0 // pred_fallthru
    _
  // Predicated region
  $region18: #{tpu_custom_call.1} parent=0 // pred_check
    _
  $region19: #{tpu_custom_call.1} parent=0 // pred_check_branch
    %120 = sbr.rel (0) target = $region21
  $region20: #{tpu_custom_call.1} parent=0 // pred_region
    _
  $region21: #{tpu_custom_call.1} parent=0 // pred_fallthru
    _

</llo_original>
